<compile_context>
chip_gen: v6e
topology: v6e:2x2x1
jax: 0.10.0
libtpu: 0.0.40
codegen_flags: <defaults>
</compile_context>

<pallas_src>
import functools

import jax
import jax.numpy as jnp
from jax import lax
from jax.experimental import pallas as pl
from jax.experimental.pallas import tpu as pltpu

EPS = 1e-5  # nn.BatchNorm2d default eps


def _build_w_pool_matrix(W, dtype):
    """(W, W//2) matrix with 0.25 at [w, w//2]; 0.25 is exact in bf16."""
    w_idx = jnp.arange(W)
    c_idx = jnp.arange(W // 2)
    return ((w_idx[:, None] // 2) == c_idx[None, :]).astype(dtype) * jnp.asarray(0.25, dtype)


def _pick_h_block(H, W, Cin, Cout, mxu_itemsize, max_block_bytes=8 * 2**20, max_pairs=32):
    """Largest even divisor Hb of H whose x block + out block + pooled scratch fit the
    budget.  Grid-constant operands (scale/shift/w/pool matrix) are NOT charged here
    (they are fetched once).  When Hb < H the flattened block dims must be x128."""
    W2 = W // 2

    def fits(hb):
        hb2 = hb // 2
        nbytes = (4 * Cin * hb * W                 # x block (f32)
                  + 4 * Cout * hb2 * W2            # out block (f32)
                  + mxu_itemsize * Cin * hb2 * W2) # pooled scratch
        return nbytes <= max_block_bytes

    def lane_ok(hb):
        if hb == H:
            return True   # full-extent last dims are always legal BlockSpec dims
        return (hb * W) % 128 == 0 and ((hb // 2) * W2) % 128 == 0

    candidates = [hb for hb in range(2, min(H, 2 * max_pairs) + 1, 2) if H % hb == 0]
    for hb in sorted(candidates, reverse=True):
        if lane_ok(hb) and fits(hb):
            return hb
    return H  # fallback: full-H block (always a legal BlockSpec)


def _make_kernel(Cin, Cout, W, Hb, mxu_dtype):
    W2 = W // 2
    Hb2 = Hb // 2

    def kernel(x_ref, scale_ref, shift_ref, w_ref, pw_ref, out_ref, pooled_ref):
        # x_ref:      (1, Cin, Hb*W)   f32, spatial flattened h-major (native NCHW)
        # scale/shift:(Cin, 1)         f32 (folded BN batch stats)
        # w_ref:      (Cout, Cin)      mxu_dtype
        # pw_ref:     (W, W2)          mxu_dtype (0 / 0.25)
        # out_ref:    (1, Cout, Hb2*W2) f32
        # pooled_ref: (Cin, Hb2*W2)    mxu_dtype VMEM scratch
        scale = scale_ref[...]
        shift = shift_ref[...]
        pw = pw_ref[...]
        # Factored pool: per H-pair, BN+ReLU (f32 VPU) + H-sum (VPU add) + W-pair
        # matmul with the tiny (W, W2) matrix; assemble the pooled slab lane-dense.
        for h2 in range(Hb2):
            base = 2 * h2 * W
            r0 = x_ref[0, :, base:base + W]          # row 2*h2   -> (Cin, W)
            r1 = x_ref[0, :, base + W:base + 2 * W]  # row 2*h2+1 -> (Cin, W)
            a = (jnp.maximum(r0 * scale + shift, 0.0)
                 + jnp.maximum(r1 * scale + shift, 0.0))          # H-pooled sum, f32
            pooled = jnp.dot(a.astype(mxu_dtype), pw,
                             preferred_element_type=jnp.float32)  # (Cin, W2)
            pooled_ref[:, h2 * W2:(h2 + 1) * W2] = pooled.astype(pooled_ref.dtype)
        # 1x1 conv (no bias) as one MXU matmul on the 4x-smaller pooled slab.
        out = jnp.dot(w_ref[...], pooled_ref[...],
                      preferred_element_type=jnp.float32)         # (Cout, Hb2*W2)
        out_ref[0] = out.astype(out_ref.dtype)

    return kernel


@functools.partial(jax.jit, static_argnames=("mxu_dtype",))
def transition_block_forward(x_nchw, gamma, beta, w_oi11, *, mxu_dtype=jnp.bfloat16):
    """x_nchw: (N, Cin, H, W); w_oi11: (Cout, Cin, 1, 1). Returns (N, Cout, H//2, W//2)."""
    N, Cin, H, W = x_nchw.shape
    Cout = w_oi11.shape[0]
    assert H % 2 == 0 and W % 2 == 0, "avg_pool2d(2) path requires even H, W"
    H2, W2 = H // 2, W // 2

    x = x_nchw.astype(jnp.float32)
    g = gamma.astype(jnp.float32)
    b = beta.astype(jnp.float32)

    # --- BatchNorm2d training-mode batch stats (one-pass E[x^2]-E[x]^2), hoisted out of
    #     the kernel and folded into per-channel scale/shift.
    mean = jnp.mean(x, axis=(0, 2, 3))
    mean_sq = jnp.mean(jnp.square(x), axis=(0, 2, 3))
    var = mean_sq - jnp.square(mean)            # biased variance, matches BN training mode
    inv = lax.rsqrt(var + EPS)
    scale = (g * inv).reshape(Cin, 1)
    shift = (b - mean * g * inv).reshape(Cin, 1)
    # TODO(synk): running_mean/running_var updates (eval-mode BN buffers) are not produced.

    w_mat = w_oi11.reshape(Cout, Cin).astype(mxu_dtype)
    pw = _build_w_pool_matrix(W, mxu_dtype)     # (W, W2)

    mxu_itemsize = jnp.dtype(mxu_dtype).itemsize
    Hb = _pick_h_block(H, W, Cin, Cout, mxu_itemsize)
    Hb2 = Hb // 2
    S_out = Hb2 * W2

    xf = x.reshape(N, Cin, H * W)               # free: NCHW is contiguous over (H, W)
    grid = (N, H // Hb)

    kernel = _make_kernel(Cin, Cout, W, Hb, mxu_dtype)

    # VMEM budget: double-buffered x/out blocks + scratch + (once-fetched) constants.
    in_block = 4 * Cin * Hb * W
    out_block = 4 * Cout * S_out
    scratch = mxu_itemsize * Cin * S_out
    consts = 4 * 2 * Cin + mxu_itemsize * (Cout * Cin + W * W2)
    need = 2 * (in_block + out_block) + scratch + 2 * consts
    vmem_limit = int(min(48 * 2**20, max(8 * 2**20, 2 * need)))  # <=48 MiB: fits v7x's 64 MiB/TC

    flops = (2 * N * Cin * H2 * W * W2          # factored W-pool matmuls
             + 2 * N * Cout * Cin * H2 * W2)    # 1x1 conv on pooled activations
    bytes_accessed = (4 * (N * Cin * H * W + N * Cout * H2 * W2)
                      + 4 * 2 * Cin + mxu_itemsize * (Cout * Cin + W * W2))

    out_flat = pl.pallas_call(
        kernel,
        out_shape=jax.ShapeDtypeStruct((N, Cout, H2 * W2), jnp.float32),
        grid=grid,
        in_specs=[
            pl.BlockSpec((1, Cin, Hb * W), lambda n, h: (n, 0, h)),
            pl.BlockSpec((Cin, 1), lambda n, h: (0, 0)),
            pl.BlockSpec((Cin, 1), lambda n, h: (0, 0)),
            pl.BlockSpec((Cout, Cin), lambda n, h: (0, 0)),
            pl.BlockSpec((W, W2), lambda n, h: (0, 0)),
        ],
        out_specs=pl.BlockSpec((1, Cout, S_out), lambda n, h: (n, 0, h)),
        scratch_shapes=[pltpu.VMEM((Cin, S_out), mxu_dtype)],
        compiler_params=pltpu.CompilerParams(
            dimension_semantics=("parallel", "parallel"),
            vmem_limit_bytes=vmem_limit),
        cost_estimate=pl.CostEstimate(flops=flops, transcendentals=0,
                                      bytes_accessed=bytes_accessed),
    )(xf, scale, shift, w_mat, pw)

    return out_flat.reshape(N, Cout, H2, W2)    # free reshape back to NCHW


def reference_forward(x, gamma, beta, w):
    """Pure-JAX NCHW reference mirroring the PyTorch forward (training-mode BN, dropRate=0)."""
    mean = jnp.mean(x, axis=(0, 2, 3), keepdims=True)
    var = jnp.mean(jnp.square(x - mean), axis=(0, 2, 3), keepdims=True)
    a = (x - mean) * lax.rsqrt(var + EPS)
    a = a * gamma.reshape(1, -1, 1, 1) + beta.reshape(1, -1, 1, 1)
    a = jnp.maximum(a, 0.0)
    conv = lax.conv_general_dilated(a, w, window_strides=(1, 1), padding="VALID",
                                    dimension_numbers=("NCHW", "OIHW", "NCHW"))
    pooled = lax.reduce_window(conv, 0.0, lax.add, window_dimensions=(1, 1, 2, 2),
                               window_strides=(1, 1, 2, 2), padding="VALID") * 0.25
    return pooled


if __name__ == "__main__":
    # TODO(synk): dropout path (dropRate > 0) not implemented; default dropRate=0.0 skips it.
    N, Cin, Cout, H, W = 2, 4, 8, 16, 16

    key = jax.random.PRNGKey(0)
    kx, kg, kb, kw = jax.random.split(key, 4)

    x = jax.random.normal(kx, (N, Cin, H, W), dtype=jnp.float32)
    gamma = 1.0 + 0.1 * jax.random.normal(kg, (Cin,), dtype=jnp.float32)   # BN weight
    beta = 0.1 * jax.random.normal(kb, (Cin,), dtype=jnp.float32)          # BN bias
    w = jax.random.normal(kw, (Cout, Cin, 1, 1), dtype=jnp.float32) * 0.3  # conv1 weight

    ref = reference_forward(x, gamma, beta, w)

    # f32 MXU path: exact check against the reference.
    out_f32 = jax.block_until_ready(
        transition_block_forward(x, gamma, beta, w, mxu_dtype=jnp.float32))
    assert out_f32.shape == (N, Cout, H // 2, W // 2), out_f32.shape
    err_f32 = float(jnp.max(jnp.abs(out_f32 - ref)))
    assert jnp.allclose(out_f32, ref, atol=1e-4, rtol=1e-4), err_f32

    # Default bf16 MXU path (v6e/v7x perf): f32 accumulation, looser tolerance.
    out_bf16 = jax.block_until_ready(transition_block_forward(x, gamma, beta, w))
    assert out_bf16.shape == (N, Cout, H // 2, W // 2), out_bf16.shape
    err_bf16 = float(jnp.max(jnp.abs(out_bf16 - ref)))
    assert jnp.allclose(out_bf16, ref, atol=5e-2, rtol=5e-2), err_bf16

    print("KERNEL_OK")
</pallas_src>

<mosaic_0001>
module attributes {stable_mosaic.version = 11 : i64} {
  func.func @kernel(%arg0: i32, %arg1: i32, %arg2: memref<1x4x256xf32, #tpu.memory_space<vmem>>, %arg3: memref<4x1xf32, #tpu.memory_space<vmem>>, %arg4: memref<4x1xf32, #tpu.memory_space<vmem>>, %arg5: memref<8x4xf32, #tpu.memory_space<vmem>>, %arg6: memref<16x8xf32, #tpu.memory_space<vmem>>, %arg7: memref<1x8x64xf32, #tpu.memory_space<vmem>>, %arg8: memref<4x64xf32, #tpu.memory_space<vmem>>) attributes {dimension_semantics = [#tpu.dimension_semantics<parallel>, #tpu.dimension_semantics<parallel>], iteration_bounds = array<i64: 2, 1>, scalar_prefetch = 0 : i64, scratch_operands = 1 : i64, tpu.core_type = #tpu.core_type<tc>, window_params = [{transform_indices = @transform_0, window_bounds = array<i64: 1, 4, 256>}, {pipeline_mode = #tpu.pipeline_mode<synchronous>, transform_indices = @transform_1, window_bounds = array<i64: 4, 1>}, {pipeline_mode = #tpu.pipeline_mode<synchronous>, transform_indices = @transform_2, window_bounds = array<i64: 4, 1>}, {pipeline_mode = #tpu.pipeline_mode<synchronous>, transform_indices = @transform_3, window_bounds = array<i64: 8, 4>}, {pipeline_mode = #tpu.pipeline_mode<synchronous>, transform_indices = @transform_4, window_bounds = array<i64: 16, 8>}, {transform_indices = @transform_5, window_bounds = array<i64: 1, 8, 64>}]} {
    %c0 = arith.constant 0 : index
    %c0_0 = arith.constant 0 : index
    %0 = vector.load %arg3[%c0, %c0_0] : memref<4x1xf32, #tpu.memory_space<vmem>>, vector<4x1xf32>
    %c0_1 = arith.constant 0 : index
    %c0_2 = arith.constant 0 : index
    %1 = vector.load %arg4[%c0_1, %c0_2] : memref<4x1xf32, #tpu.memory_space<vmem>>, vector<4x1xf32>
    %c0_3 = arith.constant 0 : index
    %c0_4 = arith.constant 0 : index
    %2 = vector.load %arg6[%c0_3, %c0_4] : memref<16x8xf32, #tpu.memory_space<vmem>>, vector<16x8xf32>
    %c0_5 = arith.constant 0 : index
    %c0_6 = arith.constant 0 : index
    %c0_7 = arith.constant 0 : index
    %3 = vector.load %arg2[%c0_5, %c0_6, %c0_7] : memref<1x4x256xf32, #tpu.memory_space<vmem>>, vector<1x4x16xf32>
    %4 = vector.shape_cast %3 : vector<1x4x16xf32> to vector<4x16xf32>
    %c0_8 = arith.constant 0 : index
    %c0_9 = arith.constant 0 : index
    %c16 = arith.constant 16 : index
    %5 = vector.load %arg2[%c0_8, %c0_9, %c16] : memref<1x4x256xf32, #tpu.memory_space<vmem>>, vector<1x4x16xf32>
    %6 = vector.shape_cast %5 : vector<1x4x16xf32> to vector<4x16xf32>
    %7 = vector.broadcast %0 : vector<4x1xf32> to vector<4x16xf32>
    %8 = arith.mulf %4, %7 : vector<4x16xf32>
    %9 = vector.broadcast %1 : vector<4x1xf32> to vector<4x16xf32>
    %10 = arith.addf %8, %9 : vector<4x16xf32>
    %cst = arith.constant 0.000000e+00 : f32
    %11 = vector.broadcast %cst : f32 to vector<4x16xf32>
    %12 = arith.maximumf %10, %11 : vector<4x16xf32>
    %13 = vector.broadcast %0 : vector<4x1xf32> to vector<4x16xf32>
    %14 = arith.mulf %6, %13 : vector<4x16xf32>
    %15 = vector.broadcast %1 : vector<4x1xf32> to vector<4x16xf32>
    %16 = arith.addf %14, %15 : vector<4x16xf32>
    %cst_10 = arith.constant 0.000000e+00 : f32
    %17 = vector.broadcast %cst_10 : f32 to vector<4x16xf32>
    %18 = arith.maximumf %16, %17 : vector<4x16xf32>
    %19 = arith.addf %12, %18 : vector<4x16xf32>
    %cst_11 = arith.constant dense<0.000000e+00> : vector<4x8xf32>
    %20 = tpu.matmul %19, %2, %cst_11 {dimension_numbers = #tpu.dot_dimension_numbers<[1], [0], [0], [1], [0, 0, 1, 1], [], []>} : vector<4x16xf32>, vector<16x8xf32>, vector<4x8xf32> -> vector<4x8xf32>
    %c0_12 = arith.constant 0 : index
    %c0_13 = arith.constant 0 : index
    %21 = vector.load %arg8[%c0_12, %c0_13] : memref<4x64xf32, #tpu.memory_space<vmem>>, vector<4x8xf32>
    tpu.vector_store %arg8[%c0_12, %c0_13], %20 {strides = array<i32>} : memref<4x64xf32, #tpu.memory_space<vmem>>, vector<4x8xf32>,
    %c0_14 = arith.constant 0 : index
    %c0_15 = arith.constant 0 : index
    %c32 = arith.constant 32 : index
    %22 = vector.load %arg2[%c0_14, %c0_15, %c32] : memref<1x4x256xf32, #tpu.memory_space<vmem>>, vector<1x4x16xf32>
    %23 = vector.shape_cast %22 : vector<1x4x16xf32> to vector<4x16xf32>
    %c0_16 = arith.constant 0 : index
    %c0_17 = arith.constant 0 : index
    %c48 = arith.constant 48 : index
    %24 = vector.load %arg2[%c0_16, %c0_17, %c48] : memref<1x4x256xf32, #tpu.memory_space<vmem>>, vector<1x4x16xf32>
    %25 = vector.shape_cast %24 : vector<1x4x16xf32> to vector<4x16xf32>
    %26 = vector.broadcast %0 : vector<4x1xf32> to vector<4x16xf32>
    %27 = arith.mulf %23, %26 : vector<4x16xf32>
    %28 = vector.broadcast %1 : vector<4x1xf32> to vector<4x16xf32>
    %29 = arith.addf %27, %28 : vector<4x16xf32>
    %cst_18 = arith.constant 0.000000e+00 : f32
    %30 = vector.broadcast %cst_18 : f32 to vector<4x16xf32>
    %31 = arith.maximumf %29, %30 : vector<4x16xf32>
    %32 = vector.broadcast %0 : vector<4x1xf32> to vector<4x16xf32>
    %33 = arith.mulf %25, %32 : vector<4x16xf32>
    %34 = vector.broadcast %1 : vector<4x1xf32> to vector<4x16xf32>
    %35 = arith.addf %33, %34 : vector<4x16xf32>
    %cst_19 = arith.constant 0.000000e+00 : f32
    %36 = vector.broadcast %cst_19 : f32 to vector<4x16xf32>
    %37 = arith.maximumf %35, %36 : vector<4x16xf32>
    %38 = arith.addf %31, %37 : vector<4x16xf32>
    %cst_20 = arith.constant dense<0.000000e+00> : vector<4x8xf32>
    %39 = tpu.matmul %38, %2, %cst_20 {dimension_numbers = #tpu.dot_dimension_numbers<[1], [0], [0], [1], [0, 0, 1, 1], [], []>} : vector<4x16xf32>, vector<16x8xf32>, vector<4x8xf32> -> vector<4x8xf32>
    %c0_21 = arith.constant 0 : index
    %c8 = arith.constant 8 : index
    %40 = vector.load %arg8[%c0_21, %c8] : memref<4x64xf32, #tpu.memory_space<vmem>>, vector<4x8xf32>
    tpu.vector_store %arg8[%c0_21, %c8], %39 {strides = array<i32>} : memref<4x64xf32, #tpu.memory_space<vmem>>, vector<4x8xf32>,
    %c0_22 = arith.constant 0 : index
    %c0_23 = arith.constant 0 : index
    %c64 = arith.constant 64 : index
    %41 = vector.load %arg2[%c0_22, %c0_23, %c64] : memref<1x4x256xf32, #tpu.memory_space<vmem>>, vector<1x4x16xf32>
    %42 = vector.shape_cast %41 : vector<1x4x16xf32> to vector<4x16xf32>
    %c0_24 = arith.constant 0 : index
    %c0_25 = arith.constant 0 : index
    %c80 = arith.constant 80 : index
    %43 = vector.load %arg2[%c0_24, %c0_25, %c80] : memref<1x4x256xf32, #tpu.memory_space<vmem>>, vector<1x4x16xf32>
    %44 = vector.shape_cast %43 : vector<1x4x16xf32> to vector<4x16xf32>
    %45 = vector.broadcast %0 : vector<4x1xf32> to vector<4x16xf32>
    %46 = arith.mulf %42, %45 : vector<4x16xf32>
    %47 = vector.broadcast %1 : vector<4x1xf32> to vector<4x16xf32>
    %48 = arith.addf %46, %47 : vector<4x16xf32>
    %cst_26 = arith.constant 0.000000e+00 : f32
    %49 = vector.broadcast %cst_26 : f32 to vector<4x16xf32>
    %50 = arith.maximumf %48, %49 : vector<4x16xf32>
    %51 = vector.broadcast %0 : vector<4x1xf32> to vector<4x16xf32>
    %52 = arith.mulf %44, %51 : vector<4x16xf32>
    %53 = vector.broadcast %1 : vector<4x1xf32> to vector<4x16xf32>
    %54 = arith.addf %52, %53 : vector<4x16xf32>
    %cst_27 = arith.constant 0.000000e+00 : f32
    %55 = vector.broadcast %cst_27 : f32 to vector<4x16xf32>
    %56 = arith.maximumf %54, %55 : vector<4x16xf32>
    %57 = arith.addf %50, %56 : vector<4x16xf32>
    %cst_28 = arith.constant dense<0.000000e+00> : vector<4x8xf32>
    %58 = tpu.matmul %57, %2, %cst_28 {dimension_numbers = #tpu.dot_dimension_numbers<[1], [0], [0], [1], [0, 0, 1, 1], [], []>} : vector<4x16xf32>, vector<16x8xf32>, vector<4x8xf32> -> vector<4x8xf32>
    %c0_29 = arith.constant 0 : index
    %c16_30 = arith.constant 16 : index
    %59 = vector.load %arg8[%c0_29, %c16_30] : memref<4x64xf32, #tpu.memory_space<vmem>>, vector<4x8xf32>
    tpu.vector_store %arg8[%c0_29, %c16_30], %58 {strides = array<i32>} : memref<4x64xf32, #tpu.memory_space<vmem>>, vector<4x8xf32>,
    %c0_31 = arith.constant 0 : index
    %c0_32 = arith.constant 0 : index
    %c96 = arith.constant 96 : index
    %60 = vector.load %arg2[%c0_31, %c0_32, %c96] : memref<1x4x256xf32, #tpu.memory_space<vmem>>, vector<1x4x16xf32>
    %61 = vector.shape_cast %60 : vector<1x4x16xf32> to vector<4x16xf32>
    %c0_33 = arith.constant 0 : index
    %c0_34 = arith.constant 0 : index
    %c112 = arith.constant 112 : index
    %62 = vector.load %arg2[%c0_33, %c0_34, %c112] : memref<1x4x256xf32, #tpu.memory_space<vmem>>, vector<1x4x16xf32>
    %63 = vector.shape_cast %62 : vector<1x4x16xf32> to vector<4x16xf32>
    %64 = vector.broadcast %0 : vector<4x1xf32> to vector<4x16xf32>
    %65 = arith.mulf %61, %64 : vector<4x16xf32>
    %66 = vector.broadcast %1 : vector<4x1xf32> to vector<4x16xf32>
    %67 = arith.addf %65, %66 : vector<4x16xf32>
    %cst_35 = arith.constant 0.000000e+00 : f32
    %68 = vector.broadcast %cst_35 : f32 to vector<4x16xf32>
    %69 = arith.maximumf %67, %68 : vector<4x16xf32>
    %70 = vector.broadcast %0 : vector<4x1xf32> to vector<4x16xf32>
    %71 = arith.mulf %63, %70 : vector<4x16xf32>
    %72 = vector.broadcast %1 : vector<4x1xf32> to vector<4x16xf32>
    %73 = arith.addf %71, %72 : vector<4x16xf32>
    %cst_36 = arith.constant 0.000000e+00 : f32
    %74 = vector.broadcast %cst_36 : f32 to vector<4x16xf32>
    %75 = arith.maximumf %73, %74 : vector<4x16xf32>
    %76 = arith.addf %69, %75 : vector<4x16xf32>
    %cst_37 = arith.constant dense<0.000000e+00> : vector<4x8xf32>
    %77 = tpu.matmul %76, %2, %cst_37 {dimension_numbers = #tpu.dot_dimension_numbers<[1], [0], [0], [1], [0, 0, 1, 1], [], []>} : vector<4x16xf32>, vector<16x8xf32>, vector<4x8xf32> -> vector<4x8xf32>
    %c0_38 = arith.constant 0 : index
    %c24 = arith.constant 24 : index
    %78 = vector.load %arg8[%c0_38, %c24] : memref<4x64xf32, #tpu.memory_space<vmem>>, vector<4x8xf32>
    tpu.vector_store %arg8[%c0_38, %c24], %77 {strides = array<i32>} : memref<4x64xf32, #tpu.memory_space<vmem>>, vector<4x8xf32>,
    %c0_39 = arith.constant 0 : index
    %c0_40 = arith.constant 0 : index
    %c128 = arith.constant 128 : index
    %79 = vector.load %arg2[%c0_39, %c0_40, %c128] : memref<1x4x256xf32, #tpu.memory_space<vmem>>, vector<1x4x16xf32>
    %80 = vector.shape_cast %79 : vector<1x4x16xf32> to vector<4x16xf32>
    %c0_41 = arith.constant 0 : index
    %c0_42 = arith.constant 0 : index
    %c144 = arith.constant 144 : index
    %81 = vector.load %arg2[%c0_41, %c0_42, %c144] : memref<1x4x256xf32, #tpu.memory_space<vmem>>, vector<1x4x16xf32>
    %82 = vector.shape_cast %81 : vector<1x4x16xf32> to vector<4x16xf32>
    %83 = vector.broadcast %0 : vector<4x1xf32> to vector<4x16xf32>
    %84 = arith.mulf %80, %83 : vector<4x16xf32>
    %85 = vector.broadcast %1 : vector<4x1xf32> to vector<4x16xf32>
    %86 = arith.addf %84, %85 : vector<4x16xf32>
    %cst_43 = arith.constant 0.000000e+00 : f32
    %87 = vector.broadcast %cst_43 : f32 to vector<4x16xf32>
    %88 = arith.maximumf %86, %87 : vector<4x16xf32>
    %89 = vector.broadcast %0 : vector<4x1xf32> to vector<4x16xf32>
    %90 = arith.mulf %82, %89 : vector<4x16xf32>
    %91 = vector.broadcast %1 : vector<4x1xf32> to vector<4x16xf32>
    %92 = arith.addf %90, %91 : vector<4x16xf32>
    %cst_44 = arith.constant 0.000000e+00 : f32
    %93 = vector.broadcast %cst_44 : f32 to vector<4x16xf32>
    %94 = arith.maximumf %92, %93 : vector<4x16xf32>
    %95 = arith.addf %88, %94 : vector<4x16xf32>
    %cst_45 = arith.constant dense<0.000000e+00> : vector<4x8xf32>
    %96 = tpu.matmul %95, %2, %cst_45 {dimension_numbers = #tpu.dot_dimension_numbers<[1], [0], [0], [1], [0, 0, 1, 1], [], []>} : vector<4x16xf32>, vector<16x8xf32>, vector<4x8xf32> -> vector<4x8xf32>
    %c0_46 = arith.constant 0 : index
    %c32_47 = arith.constant 32 : index
    %97 = vector.load %arg8[%c0_46, %c32_47] : memref<4x64xf32, #tpu.memory_space<vmem>>, vector<4x8xf32>
    tpu.vector_store %arg8[%c0_46, %c32_47], %96 {strides = array<i32>} : memref<4x64xf32, #tpu.memory_space<vmem>>, vector<4x8xf32>,
    %c0_48 = arith.constant 0 : index
    %c0_49 = arith.constant 0 : index
    %c160 = arith.constant 160 : index
    %98 = vector.load %arg2[%c0_48, %c0_49, %c160] : memref<1x4x256xf32, #tpu.memory_space<vmem>>, vector<1x4x16xf32>
    %99 = vector.shape_cast %98 : vector<1x4x16xf32> to vector<4x16xf32>
    %c0_50 = arith.constant 0 : index
    %c0_51 = arith.constant 0 : index
    %c176 = arith.constant 176 : index
    %100 = vector.load %arg2[%c0_50, %c0_51, %c176] : memref<1x4x256xf32, #tpu.memory_space<vmem>>, vector<1x4x16xf32>
    %101 = vector.shape_cast %100 : vector<1x4x16xf32> to vector<4x16xf32>
    %102 = vector.broadcast %0 : vector<4x1xf32> to vector<4x16xf32>
    %103 = arith.mulf %99, %102 : vector<4x16xf32>
    %104 = vector.broadcast %1 : vector<4x1xf32> to vector<4x16xf32>
    %105 = arith.addf %103, %104 : vector<4x16xf32>
    %cst_52 = arith.constant 0.000000e+00 : f32
    %106 = vector.broadcast %cst_52 : f32 to vector<4x16xf32>
    %107 = arith.maximumf %105, %106 : vector<4x16xf32>
    %108 = vector.broadcast %0 : vector<4x1xf32> to vector<4x16xf32>
    %109 = arith.mulf %101, %108 : vector<4x16xf32>
    %110 = vector.broadcast %1 : vector<4x1xf32> to vector<4x16xf32>
    %111 = arith.addf %109, %110 : vector<4x16xf32>
    %cst_53 = arith.constant 0.000000e+00 : f32
    %112 = vector.broadcast %cst_53 : f32 to vector<4x16xf32>
    %113 = arith.maximumf %111, %112 : vector<4x16xf32>
    %114 = arith.addf %107, %113 : vector<4x16xf32>
    %cst_54 = arith.constant dense<0.000000e+00> : vector<4x8xf32>
    %115 = tpu.matmul %114, %2, %cst_54 {dimension_numbers = #tpu.dot_dimension_numbers<[1], [0], [0], [1], [0, 0, 1, 1], [], []>} : vector<4x16xf32>, vector<16x8xf32>, vector<4x8xf32> -> vector<4x8xf32>
    %c0_55 = arith.constant 0 : index
    %c40 = arith.constant 40 : index
    %116 = vector.load %arg8[%c0_55, %c40] : memref<4x64xf32, #tpu.memory_space<vmem>>, vector<4x8xf32>
    tpu.vector_store %arg8[%c0_55, %c40], %115 {strides = array<i32>} : memref<4x64xf32, #tpu.memory_space<vmem>>, vector<4x8xf32>,
    %c0_56 = arith.constant 0 : index
    %c0_57 = arith.constant 0 : index
    %c192 = arith.constant 192 : index
    %117 = vector.load %arg2[%c0_56, %c0_57, %c192] : memref<1x4x256xf32, #tpu.memory_space<vmem>>, vector<1x4x16xf32>
    %118 = vector.shape_cast %117 : vector<1x4x16xf32> to vector<4x16xf32>
    %c0_58 = arith.constant 0 : index
    %c0_59 = arith.constant 0 : index
    %c208 = arith.constant 208 : index
    %119 = vector.load %arg2[%c0_58, %c0_59, %c208] : memref<1x4x256xf32, #tpu.memory_space<vmem>>, vector<1x4x16xf32>
    %120 = vector.shape_cast %119 : vector<1x4x16xf32> to vector<4x16xf32>
    %121 = vector.broadcast %0 : vector<4x1xf32> to vector<4x16xf32>
    %122 = arith.mulf %118, %121 : vector<4x16xf32>
    %123 = vector.broadcast %1 : vector<4x1xf32> to vector<4x16xf32>
    %124 = arith.addf %122, %123 : vector<4x16xf32>
    %cst_60 = arith.constant 0.000000e+00 : f32
    %125 = vector.broadcast %cst_60 : f32 to vector<4x16xf32>
    %126 = arith.maximumf %124, %125 : vector<4x16xf32>
    %127 = vector.broadcast %0 : vector<4x1xf32> to vector<4x16xf32>
    %128 = arith.mulf %120, %127 : vector<4x16xf32>
    %129 = vector.broadcast %1 : vector<4x1xf32> to vector<4x16xf32>
    %130 = arith.addf %128, %129 : vector<4x16xf32>
    %cst_61 = arith.constant 0.000000e+00 : f32
    %131 = vector.broadcast %cst_61 : f32 to vector<4x16xf32>
    %132 = arith.maximumf %130, %131 : vector<4x16xf32>
    %133 = arith.addf %126, %132 : vector<4x16xf32>
    %cst_62 = arith.constant dense<0.000000e+00> : vector<4x8xf32>
    %134 = tpu.matmul %133, %2, %cst_62 {dimension_numbers = #tpu.dot_dimension_numbers<[1], [0], [0], [1], [0, 0, 1, 1], [], []>} : vector<4x16xf32>, vector<16x8xf32>, vector<4x8xf32> -> vector<4x8xf32>
    %c0_63 = arith.constant 0 : index
    %c48_64 = arith.constant 48 : index
    %135 = vector.load %arg8[%c0_63, %c48_64] : memref<4x64xf32, #tpu.memory_space<vmem>>, vector<4x8xf32>
    tpu.vector_store %arg8[%c0_63, %c48_64], %134 {strides = array<i32>} : memref<4x64xf32, #tpu.memory_space<vmem>>, vector<4x8xf32>,
    %c0_65 = arith.constant 0 : index
    %c0_66 = arith.constant 0 : index
    %c224 = arith.constant 224 : index
    %136 = vector.load %arg2[%c0_65, %c0_66, %c224] : memref<1x4x256xf32, #tpu.memory_space<vmem>>, vector<1x4x16xf32>
    %137 = vector.shape_cast %136 : vector<1x4x16xf32> to vector<4x16xf32>
    %c0_67 = arith.constant 0 : index
    %c0_68 = arith.constant 0 : index
    %c240 = arith.constant 240 : index
    %138 = vector.load %arg2[%c0_67, %c0_68, %c240] : memref<1x4x256xf32, #tpu.memory_space<vmem>>, vector<1x4x16xf32>
    %139 = vector.shape_cast %138 : vector<1x4x16xf32> to vector<4x16xf32>
    %140 = vector.broadcast %0 : vector<4x1xf32> to vector<4x16xf32>
    %141 = arith.mulf %137, %140 : vector<4x16xf32>
    %142 = vector.broadcast %1 : vector<4x1xf32> to vector<4x16xf32>
    %143 = arith.addf %141, %142 : vector<4x16xf32>
    %cst_69 = arith.constant 0.000000e+00 : f32
    %144 = vector.broadcast %cst_69 : f32 to vector<4x16xf32>
    %145 = arith.maximumf %143, %144 : vector<4x16xf32>
    %146 = vector.broadcast %0 : vector<4x1xf32> to vector<4x16xf32>
    %147 = arith.mulf %139, %146 : vector<4x16xf32>
    %148 = vector.broadcast %1 : vector<4x1xf32> to vector<4x16xf32>
    %149 = arith.addf %147, %148 : vector<4x16xf32>
    %cst_70 = arith.constant 0.000000e+00 : f32
    %150 = vector.broadcast %cst_70 : f32 to vector<4x16xf32>
    %151 = arith.maximumf %149, %150 : vector<4x16xf32>
    %152 = arith.addf %145, %151 : vector<4x16xf32>
    %cst_71 = arith.constant dense<0.000000e+00> : vector<4x8xf32>
    %153 = tpu.matmul %152, %2, %cst_71 {dimension_numbers = #tpu.dot_dimension_numbers<[1], [0], [0], [1], [0, 0, 1, 1], [], []>} : vector<4x16xf32>, vector<16x8xf32>, vector<4x8xf32> -> vector<4x8xf32>
    %c0_72 = arith.constant 0 : index
    %c56 = arith.constant 56 : index
    %154 = vector.load %arg8[%c0_72, %c56] : memref<4x64xf32, #tpu.memory_space<vmem>>, vector<4x8xf32>
    tpu.vector_store %arg8[%c0_72, %c56], %153 {strides = array<i32>} : memref<4x64xf32, #tpu.memory_space<vmem>>, vector<4x8xf32>,
    %c0_73 = arith.constant 0 : index
    %c0_74 = arith.constant 0 : index
    %155 = vector.load %arg5[%c0_73, %c0_74] : memref<8x4xf32, #tpu.memory_space<vmem>>, vector<8x4xf32>
    %c0_75 = arith.constant 0 : index
    %c0_76 = arith.constant 0 : index
    %156 = vector.load %arg8[%c0_75, %c0_76] : memref<4x64xf32, #tpu.memory_space<vmem>>, vector<4x64xf32>
    %cst_77 = arith.constant dense<0.000000e+00> : vector<8x64xf32>
    %157 = tpu.matmul %155, %156, %cst_77 {dimension_numbers = #tpu.dot_dimension_numbers<[1], [0], [0], [1], [0, 0, 1, 1], [], []>} : vector<8x4xf32>, vector<4x64xf32>, vector<8x64xf32> -> vector<8x64xf32>
    %c0_78 = arith.constant 0 : index
    %c0_79 = arith.constant 0 : index
    %c0_80 = arith.constant 0 : index
    %158 = vector.load %arg7[%c0_78, %c0_79, %c0_80] : memref<1x8x64xf32, #tpu.memory_space<vmem>>, vector<1x8x64xf32>
    %159 = vector.shape_cast %158 : vector<1x8x64xf32> to vector<8x64xf32>
    %160 = vector.shape_cast %157 : vector<8x64xf32> to vector<1x8x64xf32>
    tpu.vector_store %arg7[%c0_78, %c0_79, %c0_80], %160 {strides = array<i32>} : memref<1x8x64xf32, #tpu.memory_space<vmem>>, vector<1x8x64xf32>,
    return
  }
  func.func @transform_0(%arg0: i32, %arg1: i32) -> (i32, i32, i32) {
    %c0_i32 = arith.constant 0 : i32
    %c0_i32_0 = arith.constant 0 : i32
    return %arg0, %c0_i32, %arg1 : i32, i32, i32
  }
  func.func @transform_1(%arg0: i32, %arg1: i32) -> (i32, i32) {
    %c0_i32 = arith.constant 0 : i32
    %c0_i32_0 = arith.constant 0 : i32
    %c0_i32_1 = arith.constant 0 : i32
    return %c0_i32, %c0_i32_0 : i32, i32
  }
  func.func @transform_2(%arg0: i32, %arg1: i32) -> (i32, i32) {
    %c0_i32 = arith.constant 0 : i32
    %c0_i32_0 = arith.constant 0 : i32
    %c0_i32_1 = arith.constant 0 : i32
    return %c0_i32, %c0_i32_0 : i32, i32
  }
  func.func @transform_3(%arg0: i32, %arg1: i32) -> (i32, i32) {
    %c0_i32 = arith.constant 0 : i32
    %c0_i32_0 = arith.constant 0 : i32
    %c0_i32_1 = arith.constant 0 : i32
    return %c0_i32, %c0_i32_0 : i32, i32
  }
  func.func @transform_4(%arg0: i32, %arg1: i32) -> (i32, i32) {
    %c0_i32 = arith.constant 0 : i32
    %c0_i32_0 = arith.constant 0 : i32
    %c0_i32_1 = arith.constant 0 : i32
    return %c0_i32, %c0_i32_0 : i32, i32
  }
  func.func @transform_5(%arg0: i32, %arg1: i32) -> (i32, i32, i32) {
    %c0_i32 = arith.constant 0 : i32
    %c0_i32_0 = arith.constant 0 : i32
    return %arg0, %c0_i32, %arg1 : i32, i32, i32
  }
}

</mosaic_0001>

<llo_original>
// kernel: transition_block_forward.1
$region0: #{transition_block_forward.1}
  #allocation0 [shape = 'u32[]', space=smem, size = 0x4, offset = 0x4, fixed_abs, tag = 'smem constant byte address 0x4 - core index']
  #allocation1 [shape = 'u32[144,128]{1,0:T(1,128)}', space=vmem, size = 0x12000, scoped, tag = 'internal scratch']
  #allocation2 [shape = 'f32[4,64]{1,0:T(4,128)}', space=vmem, size = 0x800, scoped, tag = 'scratch operand']
  %s0 = inlined_call_operand.vmem [shape: f32[2,4,256], index: 0, kind: input, shape index: {}]
  %s1 = inlined_call_operand.vmem [shape: f32[4,1], index: 1, kind: input, shape index: {}]
  %s2 = inlined_call_operand.vmem [shape: f32[4,1], index: 2, kind: input, shape index: {}]
  %s3 = inlined_call_operand.vmem [shape: f32[8,4], index: 3, kind: input, shape index: {}]
  %s4 = inlined_call_operand.vmem [shape: f32[16,8], index: 4, kind: input, shape index: {}]
  %s5 = inlined_call_operand.vmem [shape: f32[2,8,64], index: 5, kind: output, shape index: {}]
  %s6 = sld [smem:[#allocation0]]
  $region53: #{transition_block_forward.1} parent=0
    _
  %s8 = ssub.s32 1, %s6
  %s9 = scalar_select 0, %s8, %s6
  loop: start=0, step=1, limit=4
  $region2: #{transition_block_forward.1} parent=0 // loop_pre_header
    _
  $region3: #{transition_block_forward.1} parent=0 // loop_header
    %s11 = sphi 0, %s15
    %p12 = scmp.ge.s32.totalorder %s11, 4
    %s18 = sphi 0, %s30
    %s19 = sphi 0, %s26
    %s20 = sphi 0, %s18
    %s21 = sphi 0, %s19
    %s22 = sphi 0, %s20
    %s23 = sphi 0, %s21
    %s35 = sphi 0, %s37
    %s38 = sphi 0, %s35
    %s39 = sphi 0, %s38
    %s55 = sphi 0, %s39
    %s59 = sphi 0, %s59
    %s61 = sphi 0, %s59
    %s62 = sphi 0, %s61
    %s76 = sphi 0, %s62
    %s80 = sphi 0, %s80
    %s82 = sphi 0, %s80
    %s83 = sphi 0, %s82
    %s97 = sphi 0, %s83
    %s101 = sphi 0, %s101
    %s103 = sphi 0, %s101
    %s104 = sphi 0, %s103
    %s118 = sphi 0, %s104
    %s122 = sphi 0, %s122
    %s124 = sphi 0, %s122
    %s125 = sphi 0, %s124
    %s139 = sphi 0, %s125
    %s147 = sphi 0, %s149
    %s150 = sphi 0, %s147
    %s151 = sphi 0, %s150
    %s167 = sphi 0, %s151
  $region4: #{transition_block_forward.1} parent=0 // loop_header_branch
    %14 = sbr.rel (%p12) target = $region8
  $region5: #{transition_block_forward.1} parent=0 // loop_body
    %s16 = ssub.s32 %s11, 1
    %s17 = ssub.s32 %s11, 2
    %s24 = sadd.s32 1, %s19
    %p25 = scmp.ge.s32.totalorder %s24, 1
    %s26 = scalar_select %p25, 0, %s24
    %s27 = sadd.s32 1, %s18
    %s28 = scalar_select %p25, %s27, %s18
    %p29 = scmp.ge.s32.totalorder %s28, 2
    %s30 = scalar_select %p29, 0, %s28
    %s31 = ssub.s32 %s18, %s30
    %s32 = ssub.s32 %s19, %s26
    %s33 = sor.u32 %s31, %s32
    %p34 = scmp.eq.s32.totalorder %s33, 0
    %s36 = sadd.s32 %s35, 1
    %s37 = scalar_select %p34, %s35, %s36
    %p40 = pneg %p34
    %p41 = scmp.eq.s32.totalorder %s11, 1
    %p42 = por %p40, %p41
    %p43 = scmp.ne.s32.totalorder %s35, %s38
    %p44 = scmp.eq.s32.totalorder %s11, 0
    %p45 = por %p43, %p44
    %p46 = scmp.ne.s32.totalorder %s35, %s38
    %p47 = scmp.eq.s32.totalorder %s16, 1
    %p48 = por %p46, %p47
    %p49 = scmp.ne.s32.totalorder %s38, %s39
    %p50 = scmp.eq.s32.totalorder %s16, 0
    %p51 = por %p49, %p50
    %p52 = scmp.ne.s32.totalorder %s38, %s39
    %p53 = scmp.eq.s32.totalorder %s17, 1
    %p54 = por %p52, %p53
    %p56 = scmp.ne.s32.totalorder %s39, %s55
    %p57 = scmp.eq.s32.totalorder %s17, 0
    %p58 = por %p56, %p57
    %s60 = sadd.s32 %s59, 1
    %p63 = scmp.eq.s32.totalorder %s11, 1
    %p64 = scmp.ne.s32.totalorder %s59, %s61
    %p65 = scmp.eq.s32.totalorder %s11, 0
    %p66 = por %p64, %p65
    %p67 = scmp.ne.s32.totalorder %s59, %s61
    %p68 = scmp.eq.s32.totalorder %s16, 1
    %p69 = por %p67, %p68
    %p70 = scmp.ne.s32.totalorder %s61, %s62
    %p71 = scmp.eq.s32.totalorder %s16, 0
    %p72 = por %p70, %p71
    %p73 = scmp.ne.s32.totalorder %s61, %s62
    %p74 = scmp.eq.s32.totalorder %s17, 1
    %p75 = por %p73, %p74
    %p77 = scmp.ne.s32.totalorder %s62, %s76
    %p78 = scmp.eq.s32.totalorder %s17, 0
    %p79 = por %p77, %p78
    %s81 = sadd.s32 %s80, 1
    %p84 = scmp.eq.s32.totalorder %s11, 1
    %p85 = scmp.ne.s32.totalorder %s80, %s82
    %p86 = scmp.eq.s32.totalorder %s11, 0
    %p87 = por %p85, %p86
    %p88 = scmp.ne.s32.totalorder %s80, %s82
    %p89 = scmp.eq.s32.totalorder %s16, 1
    %p90 = por %p88, %p89
    %p91 = scmp.ne.s32.totalorder %s82, %s83
    %p92 = scmp.eq.s32.totalorder %s16, 0
    %p93 = por %p91, %p92
    %p94 = scmp.ne.s32.totalorder %s82, %s83
    %p95 = scmp.eq.s32.totalorder %s17, 1
    %p96 = por %p94, %p95
    %p98 = scmp.ne.s32.totalorder %s83, %s97
    %p99 = scmp.eq.s32.totalorder %s17, 0
    %p100 = por %p98, %p99
    %s102 = sadd.s32 %s101, 1
    %p105 = scmp.eq.s32.totalorder %s11, 1
    %p106 = scmp.ne.s32.totalorder %s101, %s103
    %p107 = scmp.eq.s32.totalorder %s11, 0
    %p108 = por %p106, %p107
    %p109 = scmp.ne.s32.totalorder %s101, %s103
    %p110 = scmp.eq.s32.totalorder %s16, 1
    %p111 = por %p109, %p110
    %p112 = scmp.ne.s32.totalorder %s103, %s104
    %p113 = scmp.eq.s32.totalorder %s16, 0
    %p114 = por %p112, %p113
    %p115 = scmp.ne.s32.totalorder %s103, %s104
    %p116 = scmp.eq.s32.totalorder %s17, 1
    %p117 = por %p115, %p116
    %p119 = scmp.ne.s32.totalorder %s104, %s118
    %p120 = scmp.eq.s32.totalorder %s17, 0
    %p121 = por %p119, %p120
    %s123 = sadd.s32 %s122, 1
    %p126 = scmp.eq.s32.totalorder %s11, 1
    %p127 = scmp.ne.s32.totalorder %s122, %s124
    %p128 = scmp.eq.s32.totalorder %s11, 0
    %p129 = por %p127, %p128
    %p130 = scmp.ne.s32.totalorder %s122, %s124
    %p131 = scmp.eq.s32.totalorder %s16, 1
    %p132 = por %p130, %p131
    %p133 = scmp.ne.s32.totalorder %s124, %s125
    %p134 = scmp.eq.s32.totalorder %s16, 0
    %p135 = por %p133, %p134
    %p136 = scmp.ne.s32.totalorder %s124, %s125
    %p137 = scmp.eq.s32.totalorder %s17, 1
    %p138 = por %p136, %p137
    %p140 = scmp.ne.s32.totalorder %s125, %s139
    %p141 = scmp.eq.s32.totalorder %s17, 0
    %p142 = por %p140, %p141
    %s143 = ssub.s32 %s18, %s30
    %s144 = ssub.s32 %s19, %s26
    %s145 = sor.u32 %s143, %s144
    %p146 = scmp.eq.s32.totalorder %s145, 0
    %s148 = sadd.s32 %s147, 1
    %s149 = scalar_select %p146, %s147, %s148
    %p152 = pneg %p146
    %p153 = scmp.eq.s32.totalorder %s11, 1
    %p154 = por %p152, %p153
    %p155 = scmp.ne.s32.totalorder %s147, %s150
    %p156 = scmp.eq.s32.totalorder %s11, 0
    %p157 = por %p155, %p156
    %p158 = scmp.ne.s32.totalorder %s147, %s150
    %p159 = scmp.eq.s32.totalorder %s16, 1
    %p160 = por %p158, %p159
    %p161 = scmp.ne.s32.totalorder %s150, %s151
    %p162 = scmp.eq.s32.totalorder %s16, 0
    %p163 = por %p161, %p162
    %p164 = scmp.ne.s32.totalorder %s150, %s151
    %p165 = scmp.eq.s32.totalorder %s17, 1
    %p166 = por %p164, %p165
    %p168 = scmp.ne.s32.totalorder %s151, %s167
    %p169 = scmp.eq.s32.totalorder %s17, 0
    %p170 = por %p168, %p169
    %p171 = scmp.le.s32.totalorder 1, %s11
    %p172 = scmp.lt.s32.totalorder %s11, 3
    %p173 = pnand %p171, %p172
    %p174 = pneg %p173
    // Predicated region
    $region9: #{transition_block_forward.1} parent=5 // pred_check
      _
    $region10: #{transition_block_forward.1} parent=5 // pred_check_branch
      %176 = sbr.rel (%p173) target = $region12
    $region11: #{transition_block_forward.1} parent=5 // pred_region
      %s177 = ssub.s32 %s11, 1
      // Predicated region
      $region13: #{transition_block_forward.1} parent=11 // pred_check
        %p178 = pneg %p72
      $region14: #{transition_block_forward.1} parent=11 // pred_check_branch
        %180 = sbr.rel (%p178) target = $region16
      $region15: #{transition_block_forward.1} parent=11 // pred_region
        _
      $region16: #{transition_block_forward.1} parent=11 // pred_fallthru
        _
      // Predicated region
      $region17: #{transition_block_forward.1} parent=11 // pred_check
        %p181 = pneg %p93
      $region18: #{transition_block_forward.1} parent=11 // pred_check_branch
        %183 = sbr.rel (%p181) target = $region20
      $region19: #{transition_block_forward.1} parent=11 // pred_region
        _
      $region20: #{transition_block_forward.1} parent=11 // pred_fallthru
        _
      // Predicated region
      $region21: #{transition_block_forward.1} parent=11 // pred_check
        %p184 = pneg %p114
      $region22: #{transition_block_forward.1} parent=11 // pred_check_branch
        %186 = sbr.rel (%p184) target = $region24
      $region23: #{transition_block_forward.1} parent=11 // pred_region
        _
      $region24: #{transition_block_forward.1} parent=11 // pred_fallthru
        _
      // Predicated region
      $region25: #{transition_block_forward.1} parent=11 // pred_check
        %p187 = pneg %p135
      $region26: #{transition_block_forward.1} parent=11 // pred_check_branch
        %189 = sbr.rel (%p187) target = $region28
      $region27: #{transition_block_forward.1} parent=11 // pred_region
        _
      $region28: #{transition_block_forward.1} parent=11 // pred_fallthru
        _
    $region12: #{transition_block_forward.1} parent=5 // pred_fallthru
      _
    %p190 = scmp.lt.s32.totalorder %s11, 2
    // Predicated region
    $region29: #{transition_block_forward.1} parent=5 // pred_check
      %p191 = pneg %p190
    $region30: #{transition_block_forward.1} parent=5 // pred_check_branch
      %193 = sbr.rel (%p191) target = $region32
    $region31: #{transition_block_forward.1} parent=5 // pred_region
      // Predicated region
      $region33: #{transition_block_forward.1} parent=31 // pred_check
        %p194 = pneg %p45
      $region34: #{transition_block_forward.1} parent=31 // pred_check_branch
        %196 = sbr.rel (%p194) target = $region36
      $region35: #{transition_block_forward.1} parent=31 // pred_region
        %s197 = smul.u32 2, %s19
        %p198 = scmp.lt.s32.totalorder %s18, 1
        %s199 = scalar_select %p198, %s18, 1
        %p200 = scmp.lt.s32.totalorder %s197, 1
        %s201 = scalar_select %p200, %s197, 1
        %s202 = smul.addr %s199, 2
        %s203 = sadd.s32 %s201, %s202
        %s204 = smul.addr %s203, 4
        %s205 = scalar_lea.vmem %s0, %s204
        %s206 = smul.u32 2, %s19
      $region36: #{transition_block_forward.1} parent=31 // pred_fallthru
        _
    $region32: #{transition_block_forward.1} parent=5 // pred_fallthru
      _
    %p207 = scmp.le.s32.totalorder 1, %s11
    %p208 = scmp.lt.s32.totalorder %s11, 3
    %p209 = pnand %p207, %p208
    %p210 = pneg %p209
    // Predicated region
    $region37: #{transition_block_forward.1} parent=5 // pred_check
      _
    $region38: #{transition_block_forward.1} parent=5 // pred_check_branch
      %212 = sbr.rel (%p209) target = $region40
    $region39: #{transition_block_forward.1} parent=5 // pred_region
      %s213 = ssub.s32 %s11, 1
      %s214 = smul.u32 2, %s21
      %p215 = scmp.lt.s32.totalorder %s20, 1
      %s216 = scalar_select %p215, %s20, 1
      %p217 = scmp.lt.s32.totalorder %s214, 1
      %s218 = scalar_select %p217, %s214, 1
      %s219 = smul.addr %s216, 2
      %s220 = sadd.s32 %s218, %s219
      %s221 = smul.addr %s220, 4
      %s222 = scalar_lea.vmem %s0, %s221
      %p223 = pneg %p51
      %p224 = pneg %p48
      %p225 = pneg %p72
      %p226 = pneg %p69
      %p227 = pneg %p93
      %p228 = pneg %p90
      %p229 = pneg %p114
      %p230 = pneg %p111
      %p231 = pneg %p135
      %p232 = pneg %p132
      %p233 = pneg %p163
      %p234 = pneg %p160
      %p235 = scmp.lt.s32.totalorder %s20, 1
      %s236 = scalar_select %p235, %s20, 1
      %p237 = scmp.lt.s32.totalorder %s21, 0
      %s238 = scalar_select %p237, %s21, 0
      %s239 = sadd.s32 %s238, %s236
      %s240 = smul.addr %s239, 8
      %s241 = scalar_lea.vmem %s5, %s240
      %s242 = smul.u32 2, %s21
      %p243 = scmp.lt.s32.totalorder %s20, 1
      %s244 = scalar_select %p243, %s20, 1
      %p245 = scmp.lt.s32.totalorder %s242, 1
      %s246 = scalar_select %p245, %s242, 1
      %s247 = smul.addr %s244, 2
      %s248 = sadd.s32 %s246, %s247
      %s249 = smul.addr %s248, 4
      %s250 = scalar_lea.vmem %s0, %s249
      %s251 = smul.u32 2, %s21
      %p252 = scmp.lt.s32.totalorder %s20, 1
      %s253 = scalar_select %p252, %s20, 1
      %p254 = scmp.lt.s32.totalorder %s21, 0
      %s255 = scalar_select %p254, %s21, 0
      %s256 = sadd.s32 %s255, %s253
      %s257 = smul.addr %s256, 8
      %s258 = scalar_lea.vmem %s5, %s257
      %v259 = vld [vmem:[%s1] sm:$0xf]
      %v260 = vld [vmem:[%s2] sm:$0xf]
      %v261 = vld [vmem:[%s4] sm:$0xff]
      %v262 = vld [vmem:[%s4 + $0x8] sm:$0xff]
      %v263 = vld [vmem:[%s250] sm:$0xf]
      %265 = vset.pattern.permute.xlu0 0
      %266 = vperm.xlu0 %265, %v259
      %v267 = vpop.permute.xlu0 %266
      %v269 = vmul.f32 %v263, %v267
      %271 = vset.pattern.permute.xlu0 0
      %272 = vperm.xlu0 %271, %v260
      %v273 = vpop.permute.xlu0 %272
      %v275 = vadd.f32 %v269, %v273
      %v276 = vmax.f32 %v275, 0.0
      %278 = vrot.lane.b32.xlu0 %v276, 112
      %v279 = vpop.permute.xlu0 %278
      %v281 = vadd.f32 %v276, %v279
      %vm282 = vcmask 130048
      %v284 = vsel %vm282, %v281, 0
      %286 = vmatprep.subr.mxu0 0.0
      %287 = vmatpush1.msra.mxu0 0.0
      %288 = vmatprep.subr.mxu0 0.0
      %289 = vmatpush1.msra.mxu0 0.0
      %290 = vmatprep.subr.mxu0 0.0
      %291 = vmatpush1.msra.mxu0 0.0
      %292 = vmatprep.subr.mxu0 0.0
      %293 = vmatpush1.msra.mxu0 0.0
      %294 = vmatprep.subr.mxu0 0.0
      %295 = vmatpush1.msra.mxu0 0.0
      %296 = vmatprep.subr.mxu0 0.0
      %297 = vmatpush1.msra.mxu0 0.0
      %298 = vmatprep.subr.mxu0 0.0
      %299 = vmatpush1.msra.mxu0 0.0
      %300 = vmatprep.subr.mxu0 0.0
      %301 = vmatpush1.msra.mxu0 0.0
      %302 = vmatprep.subr.mxu0 0.0
      %303 = vmatpush1.msra.mxu0 0.0
      %304 = vmatprep.subr.mxu0 0.0
      %305 = vmatpush1.msra.mxu0 0.0
      %306 = vmatprep.subr.mxu0 0.0
      %307 = vmatpush1.msra.mxu0 0.0
      %308 = vmatprep.subr.mxu0 0.0
      %309 = vmatpush1.msra.mxu0 0.0
      %310 = vmatprep.subr.mxu0 0.0
      %311 = vmatpush1.msra.mxu0 0.0
      %312 = vmatprep.subr.mxu0 0.0
      %313 = vmatpush1.msra.mxu0 0.0
      %314 = vmatprep.subr.mxu0 0.0
      %315 = vmatpush1.msra.mxu0 %v262
      %316 = vmatprep.subr.mxu0 0.0
      %317 = vmatpush1.msra.mxu0 %v261
      %318 = vmatprep.subr.mxu0 0.0
      %319 = vmatpush2.msra.mxu0 0.0
      %320 = vmatprep.subr.mxu0 0.0
      %321 = vmatpush2.msra.mxu0 0.0
      %322 = vmatprep.subr.mxu0 0.0
      %323 = vmatpush2.msra.mxu0 0.0
      %324 = vmatprep.subr.mxu0 0.0
      %325 = vmatpush2.msra.mxu0 0.0
      %326 = vmatprep.subr.mxu0 0.0
      %327 = vmatpush2.msra.mxu0 0.0
      %328 = vmatprep.subr.mxu0 0.0
      %329 = vmatpush2.msra.mxu0 0.0
      %330 = vmatprep.subr.mxu0 0.0
      %331 = vmatpush2.msra.mxu0 0.0
      %332 = vmatprep.subr.mxu0 0.0
      %333 = vmatpush2.msra.mxu0 0.0
      %334 = vmatprep.subr.mxu0 0.0
      %335 = vmatpush2.msra.mxu0 0.0
      %336 = vmatprep.subr.mxu0 0.0
      %337 = vmatpush2.msra.mxu0 0.0
      %338 = vmatprep.subr.mxu0 0.0
      %339 = vmatpush2.msra.mxu0 0.0
      %340 = vmatprep.subr.mxu0 0.0
      %341 = vmatpush2.msra.mxu0 0.0
      %342 = vmatprep.subr.mxu0 0.0
      %343 = vmatpush2.msra.mxu0 0.0
      %344 = vmatprep.subr.mxu0 0.0
      %345 = vmatpush2.msra.mxu0 0.0
      %346 = vmatprep.subr.mxu0 0.0
      %347 = vmatpush2.msra.mxu0 0.0
      %348 = vmatprep.subr.mxu0 0.0
      %349 = vmatpush2.msra.mxu0 0.0
      %350 = vmatprep.mubr.f32.mxu0 0.0
      %351 = vmatmul.mubr.f32.gmra.mxu0 %v284
      %v352 = vpop.f32.mrf.mxu0
      %v353 = vadd.f32 0.0, %v352
      %v354 = vpop.f32.mrf.mxu0
      %355 = vdwg.mxu0
      %vm356 = vcmask 60416
      %357 = vst.msk [vmem:[#allocation2] sm:$0xf] %vm356, %v353
      %v358 = vld [vmem:[%s250] sm:$0xf]
      %v359 = vmul.f32 %v358, %v267
      %v360 = vadd.f32 %v359, %v273
      %v361 = vmax.f32 %v360, 0.0
      %363 = vrot.lane.b32.xlu0 %v361, 112
      %v364 = vpop.permute.xlu0 %363
      %v366 = vadd.f32 %v361, %v364
      %368 = vrot.lane.b32.xlu0 %v366, 96
      %v369 = vpop.permute.xlu0 %368
      %v370 = vsel %vm282, %v369, 0
      %372 = vmatprep.subr.mxu0 0.0
      %373 = vmatpush1.msra.mxu0 0.0
      %374 = vmatprep.subr.mxu0 0.0
      %375 = vmatpush1.msra.mxu0 0.0
      %376 = vmatprep.subr.mxu0 0.0
      %377 = vmatpush1.msra.mxu0 0.0
      %378 = vmatprep.subr.mxu0 0.0
      %379 = vmatpush1.msra.mxu0 0.0
      %380 = vmatprep.subr.mxu0 0.0
      %381 = vmatpush1.msra.mxu0 0.0
      %382 = vmatprep.subr.mxu0 0.0
      %383 = vmatpush1.msra.mxu0 0.0
      %384 = vmatprep.subr.mxu0 0.0
      %385 = vmatpush1.msra.mxu0 0.0
      %386 = vmatprep.subr.mxu0 0.0
      %387 = vmatpush1.msra.mxu0 0.0
      %388 = vmatprep.subr.mxu0 0.0
      %389 = vmatpush1.msra.mxu0 0.0
      %390 = vmatprep.subr.mxu0 0.0
      %391 = vmatpush1.msra.mxu0 0.0
      %392 = vmatprep.subr.mxu0 0.0
      %393 = vmatpush1.msra.mxu0 0.0
      %394 = vmatprep.subr.mxu0 0.0
      %395 = vmatpush1.msra.mxu0 0.0
      %396 = vmatprep.subr.mxu0 0.0
      %397 = vmatpush1.msra.mxu0 0.0
      %398 = vmatprep.subr.mxu0 0.0
      %399 = vmatpush1.msra.mxu0 0.0
      %400 = vmatprep.subr.mxu0 0.0
      %401 = vmatpush1.msra.mxu0 %v262
      %402 = vmatprep.subr.mxu0 0.0
      %403 = vmatpush1.msra.mxu0 %v261
      %404 = vmatprep.subr.mxu0 0.0
      %405 = vmatpush2.msra.mxu0 0.0
      %406 = vmatprep.subr.mxu0 0.0
      %407 = vmatpush2.msra.mxu0 0.0
      %408 = vmatprep.subr.mxu0 0.0
      %409 = vmatpush2.msra.mxu0 0.0
      %410 = vmatprep.subr.mxu0 0.0
      %411 = vmatpush2.msra.mxu0 0.0
      %412 = vmatprep.subr.mxu0 0.0
      %413 = vmatpush2.msra.mxu0 0.0
      %414 = vmatprep.subr.mxu0 0.0
      %415 = vmatpush2.msra.mxu0 0.0
      %416 = vmatprep.subr.mxu0 0.0
      %417 = vmatpush2.msra.mxu0 0.0
      %418 = vmatprep.subr.mxu0 0.0
      %419 = vmatpush2.msra.mxu0 0.0
      %420 = vmatprep.subr.mxu0 0.0
      %421 = vmatpush2.msra.mxu0 0.0
      %422 = vmatprep.subr.mxu0 0.0
      %423 = vmatpush2.msra.mxu0 0.0
      %424 = vmatprep.subr.mxu0 0.0
      %425 = vmatpush2.msra.mxu0 0.0
      %426 = vmatprep.subr.mxu0 0.0
      %427 = vmatpush2.msra.mxu0 0.0
      %428 = vmatprep.subr.mxu0 0.0
      %429 = vmatpush2.msra.mxu0 0.0
      %430 = vmatprep.subr.mxu0 0.0
      %431 = vmatpush2.msra.mxu0 0.0
      %432 = vmatprep.subr.mxu0 0.0
      %433 = vmatpush2.msra.mxu0 0.0
      %434 = vmatprep.subr.mxu0 0.0
      %435 = vmatpush2.msra.mxu0 0.0
      %436 = vmatprep.mubr.f32.mxu0 0.0
      %437 = vmatmul.mubr.f32.gmra.mxu0 %v370
      %v438 = vpop.f32.mrf.mxu0
      %v439 = vadd.f32 0.0, %v438
      %v440 = vpop.f32.mrf.mxu0
      %441 = vdwg.mxu0
      %443 = vrot.lane.b32.xlu0 %v439, 8
      %v444 = vpop.permute.xlu0 %443
      %vm446 = vcmask 126016
      %447 = vst.msk [vmem:[#allocation2] sm:$0xf] %vm446, %v444
      %v448 = vld [vmem:[%s250] sm:$0xf]
      %v449 = vmul.f32 %v448, %v267
      %v450 = vadd.f32 %v449, %v273
      %v451 = vmax.f32 %v450, 0.0
      %453 = vrot.lane.b32.xlu0 %v451, 112
      %v454 = vpop.permute.xlu0 %453
      %v456 = vadd.f32 %v451, %v454
      %458 = vrot.lane.b32.xlu0 %v456, 64
      %v459 = vpop.permute.xlu0 %458
      %v460 = vsel %vm282, %v459, 0
      %462 = vmatprep.subr.mxu0 0.0
      %463 = vmatpush1.msra.mxu0 0.0
      %464 = vmatprep.subr.mxu0 0.0
      %465 = vmatpush1.msra.mxu0 0.0
      %466 = vmatprep.subr.mxu0 0.0
      %467 = vmatpush1.msra.mxu0 0.0
      %468 = vmatprep.subr.mxu0 0.0
      %469 = vmatpush1.msra.mxu0 0.0
      %470 = vmatprep.subr.mxu0 0.0
      %471 = vmatpush1.msra.mxu0 0.0
      %472 = vmatprep.subr.mxu0 0.0
      %473 = vmatpush1.msra.mxu0 0.0
      %474 = vmatprep.subr.mxu0 0.0
      %475 = vmatpush1.msra.mxu0 0.0
      %476 = vmatprep.subr.mxu0 0.0
      %477 = vmatpush1.msra.mxu0 0.0
      %478 = vmatprep.subr.mxu0 0.0
      %479 = vmatpush1.msra.mxu0 0.0
      %480 = vmatprep.subr.mxu0 0.0
      %481 = vmatpush1.msra.mxu0 0.0
      %482 = vmatprep.subr.mxu0 0.0
      %483 = vmatpush1.msra.mxu0 0.0
      %484 = vmatprep.subr.mxu0 0.0
      %485 = vmatpush1.msra.mxu0 0.0
      %486 = vmatprep.subr.mxu0 0.0
      %487 = vmatpush1.msra.mxu0 0.0
      %488 = vmatprep.subr.mxu0 0.0
      %489 = vmatpush1.msra.mxu0 0.0
      %490 = vmatprep.subr.mxu0 0.0
      %491 = vmatpush1.msra.mxu0 %v262
      %492 = vmatprep.subr.mxu0 0.0
      %493 = vmatpush1.msra.mxu0 %v261
      %494 = vmatprep.subr.mxu0 0.0
      %495 = vmatpush2.msra.mxu0 0.0
      %496 = vmatprep.subr.mxu0 0.0
      %497 = vmatpush2.msra.mxu0 0.0
      %498 = vmatprep.subr.mxu0 0.0
      %499 = vmatpush2.msra.mxu0 0.0
      %500 = vmatprep.subr.mxu0 0.0
      %501 = vmatpush2.msra.mxu0 0.0
      %502 = vmatprep.subr.mxu0 0.0
      %503 = vmatpush2.msra.mxu0 0.0
      %504 = vmatprep.subr.mxu0 0.0
      %505 = vmatpush2.msra.mxu0 0.0
      %506 = vmatprep.subr.mxu0 0.0
      %507 = vmatpush2.msra.mxu0 0.0
      %508 = vmatprep.subr.mxu0 0.0
      %509 = vmatpush2.msra.mxu0 0.0
      %510 = vmatprep.subr.mxu0 0.0
      %511 = vmatpush2.msra.mxu0 0.0
      %512 = vmatprep.subr.mxu0 0.0
      %513 = vmatpush2.msra.mxu0 0.0
      %514 = vmatprep.subr.mxu0 0.0
      %515 = vmatpush2.msra.mxu0 0.0
      %516 = vmatprep.subr.mxu0 0.0
      %517 = vmatpush2.msra.mxu0 0.0
      %518 = vmatprep.subr.mxu0 0.0
      %519 = vmatpush2.msra.mxu0 0.0
      %520 = vmatprep.subr.mxu0 0.0
      %521 = vmatpush2.msra.mxu0 0.0
      %522 = vmatprep.subr.mxu0 0.0
      %523 = vmatpush2.msra.mxu0 0.0
      %524 = vmatprep.subr.mxu0 0.0
      %525 = vmatpush2.msra.mxu0 0.0
      %526 = vmatprep.mubr.f32.mxu0 0.0
      %527 = vmatmul.mubr.f32.gmra.mxu0 %v460
      %v528 = vpop.f32.mrf.mxu0
      %v529 = vadd.f32 0.0, %v528
      %v530 = vpop.f32.mrf.mxu0
      %531 = vdwg.mxu0
      %533 = vrot.lane.b32.xlu0 %v529, 16
      %v534 = vpop.permute.xlu0 %533
      %vm536 = vcmask 191616
      %537 = vst.msk [vmem:[#allocation2] sm:$0xf] %vm536, %v534
      %v538 = vld [vmem:[%s250] sm:$0xf]
      %v539 = vmul.f32 %v538, %v267
      %v540 = vadd.f32 %v539, %v273
      %v541 = vmax.f32 %v540, 0.0
      %543 = vrot.lane.b32.xlu0 %v541, 112
      %v544 = vpop.permute.xlu0 %543
      %v546 = vadd.f32 %v541, %v544
      %548 = vrot.lane.b32.xlu0 %v546, 32
      %v549 = vpop.permute.xlu0 %548
      %v550 = vsel %vm282, %v549, 0
      %552 = vmatprep.subr.mxu0 0.0
      %553 = vmatpush1.msra.mxu0 0.0
      %554 = vmatprep.subr.mxu0 0.0
      %555 = vmatpush1.msra.mxu0 0.0
      %556 = vmatprep.subr.mxu0 0.0
      %557 = vmatpush1.msra.mxu0 0.0
      %558 = vmatprep.subr.mxu0 0.0
      %559 = vmatpush1.msra.mxu0 0.0
      %560 = vmatprep.subr.mxu0 0.0
      %561 = vmatpush1.msra.mxu0 0.0
      %562 = vmatprep.subr.mxu0 0.0
      %563 = vmatpush1.msra.mxu0 0.0
      %564 = vmatprep.subr.mxu0 0.0
      %565 = vmatpush1.msra.mxu0 0.0
      %566 = vmatprep.subr.mxu0 0.0
      %567 = vmatpush1.msra.mxu0 0.0
      %568 = vmatprep.subr.mxu0 0.0
      %569 = vmatpush1.msra.mxu0 0.0
      %570 = vmatprep.subr.mxu0 0.0
      %571 = vmatpush1.msra.mxu0 0.0
      %572 = vmatprep.subr.mxu0 0.0
      %573 = vmatpush1.msra.mxu0 0.0
      %574 = vmatprep.subr.mxu0 0.0
      %575 = vmatpush1.msra.mxu0 0.0
      %576 = vmatprep.subr.mxu0 0.0
      %577 = vmatpush1.msra.mxu0 0.0
      %578 = vmatprep.subr.mxu0 0.0
      %579 = vmatpush1.msra.mxu0 0.0
      %580 = vmatprep.subr.mxu0 0.0
      %581 = vmatpush1.msra.mxu0 %v262
      %582 = vmatprep.subr.mxu0 0.0
      %583 = vmatpush1.msra.mxu0 %v261
      %584 = vmatprep.subr.mxu0 0.0
      %585 = vmatpush2.msra.mxu0 0.0
      %586 = vmatprep.subr.mxu0 0.0
      %587 = vmatpush2.msra.mxu0 0.0
      %588 = vmatprep.subr.mxu0 0.0
      %589 = vmatpush2.msra.mxu0 0.0
      %590 = vmatprep.subr.mxu0 0.0
      %591 = vmatpush2.msra.mxu0 0.0
      %592 = vmatprep.subr.mxu0 0.0
      %593 = vmatpush2.msra.mxu0 0.0
      %594 = vmatprep.subr.mxu0 0.0
      %595 = vmatpush2.msra.mxu0 0.0
      %596 = vmatprep.subr.mxu0 0.0
      %597 = vmatpush2.msra.mxu0 0.0
      %598 = vmatprep.subr.mxu0 0.0
      %599 = vmatpush2.msra.mxu0 0.0
      %600 = vmatprep.subr.mxu0 0.0
      %601 = vmatpush2.msra.mxu0 0.0
      %602 = vmatprep.subr.mxu0 0.0
      %603 = vmatpush2.msra.mxu0 0.0
      %604 = vmatprep.subr.mxu0 0.0
      %605 = vmatpush2.msra.mxu0 0.0
      %606 = vmatprep.subr.mxu0 0.0
      %607 = vmatpush2.msra.mxu0 0.0
      %608 = vmatprep.subr.mxu0 0.0
      %609 = vmatpush2.msra.mxu0 0.0
      %610 = vmatprep.subr.mxu0 0.0
      %611 = vmatpush2.msra.mxu0 0.0
      %612 = vmatprep.subr.mxu0 0.0
      %613 = vmatpush2.msra.mxu0 0.0
      %614 = vmatprep.subr.mxu0 0.0
      %615 = vmatpush2.msra.mxu0 0.0
      %616 = vmatprep.mubr.f32.mxu0 0.0
      %617 = vmatmul.mubr.f32.gmra.mxu0 %v550
      %v618 = vpop.f32.mrf.mxu0
      %v619 = vadd.f32 0.0, %v618
      %v620 = vpop.f32.mrf.mxu0
      %621 = vdwg.mxu0
      %623 = vrot.lane.b32.xlu0 %v619, 24
      %v624 = vpop.permute.xlu0 %623
      %vm626 = vcmask 257216
      %627 = vst.msk [vmem:[#allocation2] sm:$0xf] %vm626, %v624
      %v628 = vld [vmem:[%s250 + $0x4] sm:$0xf]
      %v629 = vmul.f32 %v628, %v267
      %v630 = vadd.f32 %v629, %v273
      %v631 = vmax.f32 %v630, 0.0
      %633 = vrot.lane.b32.xlu0 %v631, 112
      %v634 = vpop.permute.xlu0 %633
      %v636 = vadd.f32 %v631, %v634
      %v638 = vsel %vm282, %v636, 0
      %640 = vmatprep.subr.mxu0 0.0
      %641 = vmatpush1.msra.mxu0 0.0
      %642 = vmatprep.subr.mxu0 0.0
      %643 = vmatpush1.msra.mxu0 0.0
      %644 = vmatprep.subr.mxu0 0.0
      %645 = vmatpush1.msra.mxu0 0.0
      %646 = vmatprep.subr.mxu0 0.0
      %647 = vmatpush1.msra.mxu0 0.0
      %648 = vmatprep.subr.mxu0 0.0
      %649 = vmatpush1.msra.mxu0 0.0
      %650 = vmatprep.subr.mxu0 0.0
      %651 = vmatpush1.msra.mxu0 0.0
      %652 = vmatprep.subr.mxu0 0.0
      %653 = vmatpush1.msra.mxu0 0.0
      %654 = vmatprep.subr.mxu0 0.0
      %655 = vmatpush1.msra.mxu0 0.0
      %656 = vmatprep.subr.mxu0 0.0
      %657 = vmatpush1.msra.mxu0 0.0
      %658 = vmatprep.subr.mxu0 0.0
      %659 = vmatpush1.msra.mxu0 0.0
      %660 = vmatprep.subr.mxu0 0.0
      %661 = vmatpush1.msra.mxu0 0.0
      %662 = vmatprep.subr.mxu0 0.0
      %663 = vmatpush1.msra.mxu0 0.0
      %664 = vmatprep.subr.mxu0 0.0
      %665 = vmatpush1.msra.mxu0 0.0
      %666 = vmatprep.subr.mxu0 0.0
      %667 = vmatpush1.msra.mxu0 0.0
      %668 = vmatprep.subr.mxu0 0.0
      %669 = vmatpush1.msra.mxu0 %v262
      %670 = vmatprep.subr.mxu0 0.0
      %671 = vmatpush1.msra.mxu0 %v261
      %672 = vmatprep.subr.mxu0 0.0
      %673 = vmatpush2.msra.mxu0 0.0
      %674 = vmatprep.subr.mxu0 0.0
      %675 = vmatpush2.msra.mxu0 0.0
      %676 = vmatprep.subr.mxu0 0.0
      %677 = vmatpush2.msra.mxu0 0.0
      %678 = vmatprep.subr.mxu0 0.0
      %679 = vmatpush2.msra.mxu0 0.0
      %680 = vmatprep.subr.mxu0 0.0
      %681 = vmatpush2.msra.mxu0 0.0
      %682 = vmatprep.subr.mxu0 0.0
      %683 = vmatpush2.msra.mxu0 0.0
      %684 = vmatprep.subr.mxu0 0.0
      %685 = vmatpush2.msra.mxu0 0.0
      %686 = vmatprep.subr.mxu0 0.0
      %687 = vmatpush2.msra.mxu0 0.0
      %688 = vmatprep.subr.mxu0 0.0
      %689 = vmatpush2.msra.mxu0 0.0
      %690 = vmatprep.subr.mxu0 0.0
      %691 = vmatpush2.msra.mxu0 0.0
      %692 = vmatprep.subr.mxu0 0.0
      %693 = vmatpush2.msra.mxu0 0.0
      %694 = vmatprep.subr.mxu0 0.0
      %695 = vmatpush2.msra.mxu0 0.0
      %696 = vmatprep.subr.mxu0 0.0
      %697 = vmatpush2.msra.mxu0 0.0
      %698 = vmatprep.subr.mxu0 0.0
      %699 = vmatpush2.msra.mxu0 0.0
      %700 = vmatprep.subr.mxu0 0.0
      %701 = vmatpush2.msra.mxu0 0.0
      %702 = vmatprep.subr.mxu0 0.0
      %703 = vmatpush2.msra.mxu0 0.0
      %704 = vmatprep.mubr.f32.mxu0 0.0
      %705 = vmatmul.mubr.f32.gmra.mxu0 %v638
      %v706 = vpop.f32.mrf.mxu0
      %v707 = vadd.f32 0.0, %v706
      %v708 = vpop.f32.mrf.mxu0
      %709 = vdwg.mxu0
      %711 = vrot.lane.b32.xlu0 %v707, 32
      %v712 = vpop.permute.xlu0 %711
      %vm714 = vcmask 322816
      %715 = vst.msk [vmem:[#allocation2] sm:$0xf] %vm714, %v712
      %v716 = vld [vmem:[%s250 + $0x4] sm:$0xf]
      %v717 = vmul.f32 %v716, %v267
      %v718 = vadd.f32 %v717, %v273
      %v719 = vmax.f32 %v718, 0.0
      %721 = vrot.lane.b32.xlu0 %v719, 112
      %v722 = vpop.permute.xlu0 %721
      %v724 = vadd.f32 %v719, %v722
      %726 = vrot.lane.b32.xlu0 %v724, 96
      %v727 = vpop.permute.xlu0 %726
      %v728 = vsel %vm282, %v727, 0
      %730 = vmatprep.subr.mxu0 0.0
      %731 = vmatpush1.msra.mxu0 0.0
      %732 = vmatprep.subr.mxu0 0.0
      %733 = vmatpush1.msra.mxu0 0.0
      %734 = vmatprep.subr.mxu0 0.0
      %735 = vmatpush1.msra.mxu0 0.0
      %736 = vmatprep.subr.mxu0 0.0
      %737 = vmatpush1.msra.mxu0 0.0
      %738 = vmatprep.subr.mxu0 0.0
      %739 = vmatpush1.msra.mxu0 0.0
      %740 = vmatprep.subr.mxu0 0.0
      %741 = vmatpush1.msra.mxu0 0.0
      %742 = vmatprep.subr.mxu0 0.0
      %743 = vmatpush1.msra.mxu0 0.0
      %744 = vmatprep.subr.mxu0 0.0
      %745 = vmatpush1.msra.mxu0 0.0
      %746 = vmatprep.subr.mxu0 0.0
      %747 = vmatpush1.msra.mxu0 0.0
      %748 = vmatprep.subr.mxu0 0.0
      %749 = vmatpush1.msra.mxu0 0.0
      %750 = vmatprep.subr.mxu0 0.0
      %751 = vmatpush1.msra.mxu0 0.0
      %752 = vmatprep.subr.mxu0 0.0
      %753 = vmatpush1.msra.mxu0 0.0
      %754 = vmatprep.subr.mxu0 0.0
      %755 = vmatpush1.msra.mxu0 0.0
      %756 = vmatprep.subr.mxu0 0.0
      %757 = vmatpush1.msra.mxu0 0.0
      %758 = vmatprep.subr.mxu0 0.0
      %759 = vmatpush1.msra.mxu0 %v262
      %760 = vmatprep.subr.mxu0 0.0
      %761 = vmatpush1.msra.mxu0 %v261
      %762 = vmatprep.subr.mxu0 0.0
      %763 = vmatpush2.msra.mxu0 0.0
      %764 = vmatprep.subr.mxu0 0.0
      %765 = vmatpush2.msra.mxu0 0.0
      %766 = vmatprep.subr.mxu0 0.0
      %767 = vmatpush2.msra.mxu0 0.0
      %768 = vmatprep.subr.mxu0 0.0
      %769 = vmatpush2.msra.mxu0 0.0
      %770 = vmatprep.subr.mxu0 0.0
      %771 = vmatpush2.msra.mxu0 0.0
      %772 = vmatprep.subr.mxu0 0.0
      %773 = vmatpush2.msra.mxu0 0.0
      %774 = vmatprep.subr.mxu0 0.0
      %775 = vmatpush2.msra.mxu0 0.0
      %776 = vmatprep.subr.mxu0 0.0
      %777 = vmatpush2.msra.mxu0 0.0
      %778 = vmatprep.subr.mxu0 0.0
      %779 = vmatpush2.msra.mxu0 0.0
      %780 = vmatprep.subr.mxu0 0.0
      %781 = vmatpush2.msra.mxu0 0.0
      %782 = vmatprep.subr.mxu0 0.0
      %783 = vmatpush2.msra.mxu0 0.0
      %784 = vmatprep.subr.mxu0 0.0
      %785 = vmatpush2.msra.mxu0 0.0
      %786 = vmatprep.subr.mxu0 0.0
      %787 = vmatpush2.msra.mxu0 0.0
      %788 = vmatprep.subr.mxu0 0.0
      %789 = vmatpush2.msra.mxu0 0.0
      %790 = vmatprep.subr.mxu0 0.0
      %791 = vmatpush2.msra.mxu0 0.0
      %792 = vmatprep.subr.mxu0 0.0
      %793 = vmatpush2.msra.mxu0 0.0
      %794 = vmatprep.mubr.f32.mxu0 0.0
      %795 = vmatmul.mubr.f32.gmra.mxu0 %v728
      %v796 = vpop.f32.mrf.mxu0
      %v797 = vadd.f32 0.0, %v796
      %v798 = vpop.f32.mrf.mxu0
      %799 = vdwg.mxu0
      %801 = vrot.lane.b32.xlu0 %v797, 40
      %v802 = vpop.permute.xlu0 %801
      %vm804 = vcmask 388416
      %805 = vst.msk [vmem:[#allocation2] sm:$0xf] %vm804, %v802
      %v806 = vld [vmem:[%s250 + $0x4] sm:$0xf]
      %v807 = vmul.f32 %v806, %v267
      %v808 = vadd.f32 %v807, %v273
      %v809 = vmax.f32 %v808, 0.0
      %811 = vrot.lane.b32.xlu0 %v809, 112
      %v812 = vpop.permute.xlu0 %811
      %v814 = vadd.f32 %v809, %v812
      %816 = vrot.lane.b32.xlu0 %v814, 64
      %v817 = vpop.permute.xlu0 %816
      %v818 = vsel %vm282, %v817, 0
      %820 = vmatprep.subr.mxu0 0.0
      %821 = vmatpush1.msra.mxu0 0.0
      %822 = vmatprep.subr.mxu0 0.0
      %823 = vmatpush1.msra.mxu0 0.0
      %824 = vmatprep.subr.mxu0 0.0
      %825 = vmatpush1.msra.mxu0 0.0
      %826 = vmatprep.subr.mxu0 0.0
      %827 = vmatpush1.msra.mxu0 0.0
      %828 = vmatprep.subr.mxu0 0.0
      %829 = vmatpush1.msra.mxu0 0.0
      %830 = vmatprep.subr.mxu0 0.0
      %831 = vmatpush1.msra.mxu0 0.0
      %832 = vmatprep.subr.mxu0 0.0
      %833 = vmatpush1.msra.mxu0 0.0
      %834 = vmatprep.subr.mxu0 0.0
      %835 = vmatpush1.msra.mxu0 0.0
      %836 = vmatprep.subr.mxu0 0.0
      %837 = vmatpush1.msra.mxu0 0.0
      %838 = vmatprep.subr.mxu0 0.0
      %839 = vmatpush1.msra.mxu0 0.0
      %840 = vmatprep.subr.mxu0 0.0
      %841 = vmatpush1.msra.mxu0 0.0
      %842 = vmatprep.subr.mxu0 0.0
      %843 = vmatpush1.msra.mxu0 0.0
      %844 = vmatprep.subr.mxu0 0.0
      %845 = vmatpush1.msra.mxu0 0.0
      %846 = vmatprep.subr.mxu0 0.0
      %847 = vmatpush1.msra.mxu0 0.0
      %848 = vmatprep.subr.mxu0 0.0
      %849 = vmatpush1.msra.mxu0 %v262
      %850 = vmatprep.subr.mxu0 0.0
      %851 = vmatpush1.msra.mxu0 %v261
      %852 = vmatprep.subr.mxu0 0.0
      %853 = vmatpush2.msra.mxu0 0.0
      %854 = vmatprep.subr.mxu0 0.0
      %855 = vmatpush2.msra.mxu0 0.0
      %856 = vmatprep.subr.mxu0 0.0
      %857 = vmatpush2.msra.mxu0 0.0
      %858 = vmatprep.subr.mxu0 0.0
      %859 = vmatpush2.msra.mxu0 0.0
      %860 = vmatprep.subr.mxu0 0.0
      %861 = vmatpush2.msra.mxu0 0.0
      %862 = vmatprep.subr.mxu0 0.0
      %863 = vmatpush2.msra.mxu0 0.0
      %864 = vmatprep.subr.mxu0 0.0
      %865 = vmatpush2.msra.mxu0 0.0
      %866 = vmatprep.subr.mxu0 0.0
      %867 = vmatpush2.msra.mxu0 0.0
      %868 = vmatprep.subr.mxu0 0.0
      %869 = vmatpush2.msra.mxu0 0.0
      %870 = vmatprep.subr.mxu0 0.0
      %871 = vmatpush2.msra.mxu0 0.0
      %872 = vmatprep.subr.mxu0 0.0
      %873 = vmatpush2.msra.mxu0 0.0
      %874 = vmatprep.subr.mxu0 0.0
      %875 = vmatpush2.msra.mxu0 0.0
      %876 = vmatprep.subr.mxu0 0.0
      %877 = vmatpush2.msra.mxu0 0.0
      %878 = vmatprep.subr.mxu0 0.0
      %879 = vmatpush2.msra.mxu0 0.0
      %880 = vmatprep.subr.mxu0 0.0
      %881 = vmatpush2.msra.mxu0 0.0
      %882 = vmatprep.subr.mxu0 0.0
      %883 = vmatpush2.msra.mxu0 0.0
      %884 = vmatprep.mubr.f32.mxu0 0.0
      %885 = vmatmul.mubr.f32.gmra.mxu0 %v818
      %v886 = vpop.f32.mrf.mxu0
      %v887 = vadd.f32 0.0, %v886
      %v888 = vpop.f32.mrf.mxu0
      %889 = vdwg.mxu0
      %891 = vrot.lane.b32.xlu0 %v887, 48
      %v892 = vpop.permute.xlu0 %891
      %vm894 = vcmask 454016
      %895 = vst.msk [vmem:[#allocation2] sm:$0xf] %vm894, %v892
      %v896 = vld [vmem:[%s250 + $0x4] sm:$0xf]
      %v897 = vmul.f32 %v896, %v267
      %v898 = vadd.f32 %v897, %v273
      %v899 = vmax.f32 %v898, 0.0
      %901 = vrot.lane.b32.xlu0 %v899, 112
      %v902 = vpop.permute.xlu0 %901
      %v904 = vadd.f32 %v899, %v902
      %906 = vrot.lane.b32.xlu0 %v904, 32
      %v907 = vpop.permute.xlu0 %906
      %v908 = vsel %vm282, %v907, 0
      %910 = vmatprep.subr.mxu0 0.0
      %911 = vmatpush1.msra.mxu0 0.0
      %912 = vmatprep.subr.mxu0 0.0
      %913 = vmatpush1.msra.mxu0 0.0
      %914 = vmatprep.subr.mxu0 0.0
      %915 = vmatpush1.msra.mxu0 0.0
      %916 = vmatprep.subr.mxu0 0.0
      %917 = vmatpush1.msra.mxu0 0.0
      %918 = vmatprep.subr.mxu0 0.0
      %919 = vmatpush1.msra.mxu0 0.0
      %920 = vmatprep.subr.mxu0 0.0
      %921 = vmatpush1.msra.mxu0 0.0
      %922 = vmatprep.subr.mxu0 0.0
      %923 = vmatpush1.msra.mxu0 0.0
      %924 = vmatprep.subr.mxu0 0.0
      %925 = vmatpush1.msra.mxu0 0.0
      %926 = vmatprep.subr.mxu0 0.0
      %927 = vmatpush1.msra.mxu0 0.0
      %928 = vmatprep.subr.mxu0 0.0
      %929 = vmatpush1.msra.mxu0 0.0
      %930 = vmatprep.subr.mxu0 0.0
      %931 = vmatpush1.msra.mxu0 0.0
      %932 = vmatprep.subr.mxu0 0.0
      %933 = vmatpush1.msra.mxu0 0.0
      %934 = vmatprep.subr.mxu0 0.0
      %935 = vmatpush1.msra.mxu0 0.0
      %936 = vmatprep.subr.mxu0 0.0
      %937 = vmatpush1.msra.mxu0 0.0
      %938 = vmatprep.subr.mxu0 0.0
      %939 = vmatpush1.msra.mxu0 %v262
      %940 = vmatprep.subr.mxu0 0.0
      %941 = vmatpush1.msra.mxu0 %v261
      %942 = vmatprep.subr.mxu0 0.0
      %943 = vmatpush2.msra.mxu0 0.0
      %944 = vmatprep.subr.mxu0 0.0
      %945 = vmatpush2.msra.mxu0 0.0
      %946 = vmatprep.subr.mxu0 0.0
      %947 = vmatpush2.msra.mxu0 0.0
      %948 = vmatprep.subr.mxu0 0.0
      %949 = vmatpush2.msra.mxu0 0.0
      %950 = vmatprep.subr.mxu0 0.0
      %951 = vmatpush2.msra.mxu0 0.0
      %952 = vmatprep.subr.mxu0 0.0
      %953 = vmatpush2.msra.mxu0 0.0
      %954 = vmatprep.subr.mxu0 0.0
      %955 = vmatpush2.msra.mxu0 0.0
      %956 = vmatprep.subr.mxu0 0.0
      %957 = vmatpush2.msra.mxu0 0.0
      %958 = vmatprep.subr.mxu0 0.0
      %959 = vmatpush2.msra.mxu0 0.0
      %960 = vmatprep.subr.mxu0 0.0
      %961 = vmatpush2.msra.mxu0 0.0
      %962 = vmatprep.subr.mxu0 0.0
      %963 = vmatpush2.msra.mxu0 0.0
      %964 = vmatprep.subr.mxu0 0.0
      %965 = vmatpush2.msra.mxu0 0.0
      %966 = vmatprep.subr.mxu0 0.0
      %967 = vmatpush2.msra.mxu0 0.0
      %968 = vmatprep.subr.mxu0 0.0
      %969 = vmatpush2.msra.mxu0 0.0
      %970 = vmatprep.subr.mxu0 0.0
      %971 = vmatpush2.msra.mxu0 0.0
      %972 = vmatprep.subr.mxu0 0.0
      %973 = vmatpush2.msra.mxu0 0.0
      %974 = vmatprep.mubr.f32.mxu0 0.0
      %975 = vmatmul.mubr.f32.gmra.mxu0 %v908
      %v976 = vpop.f32.mrf.mxu0
      %v977 = vadd.f32 0.0, %v976
      %v978 = vpop.f32.mrf.mxu0
      %979 = vdwg.mxu0
      %981 = vrot.lane.b32.xlu0 %v977, 56
      %v982 = vpop.permute.xlu0 %981
      %vm984 = vcmask 519616
      %985 = vst.msk [vmem:[#allocation2] sm:$0xf] %vm984, %v982
      %v986 = vld [vmem:[%s3] sm:$0xff]
      %v987 = vld [vmem:[#allocation2] sm:$0xf]
      %vm988 = vcmask 31744
      %v990 = vsel %vm988, %v986, 0
      %vm992 = vcmask 1043456
      %v994 = vsel %vm992, %v987, 0
      %996 = vmatprep.subr.mxu0 0.0
      %997 = vmatpush1.msra.mxu0 0.0
      %998 = vmatprep.subr.mxu0 0.0
      %999 = vmatpush1.msra.mxu0 0.0
      %1000 = vmatprep.subr.mxu0 0.0
      %1001 = vmatpush1.msra.mxu0 0.0
      %1002 = vmatprep.subr.mxu0 0.0
      %1003 = vmatpush1.msra.mxu0 0.0
      %1004 = vmatprep.subr.mxu0 0.0
      %1005 = vmatpush1.msra.mxu0 0.0
      %1006 = vmatprep.subr.mxu0 0.0
      %1007 = vmatpush1.msra.mxu0 0.0
      %1008 = vmatprep.subr.mxu0 0.0
      %1009 = vmatpush1.msra.mxu0 0.0
      %1010 = vmatprep.subr.mxu0 0.0
      %1011 = vmatpush1.msra.mxu0 0.0
      %1012 = vmatprep.subr.mxu0 0.0
      %1013 = vmatpush1.msra.mxu0 0.0
      %1014 = vmatprep.subr.mxu0 0.0
      %1015 = vmatpush1.msra.mxu0 0.0
      %1016 = vmatprep.subr.mxu0 0.0
      %1017 = vmatpush1.msra.mxu0 0.0
      %1018 = vmatprep.subr.mxu0 0.0
      %1019 = vmatpush1.msra.mxu0 0.0
      %1020 = vmatprep.subr.mxu0 0.0
      %1021 = vmatpush1.msra.mxu0 0.0
      %1022 = vmatprep.subr.mxu0 0.0
      %1023 = vmatpush1.msra.mxu0 0.0
      %1024 = vmatprep.subr.mxu0 0.0
      %1025 = vmatpush1.msra.mxu0 0.0
      %1026 = vmatprep.subr.mxu0 0.0
      %1027 = vmatpush1.msra.mxu0 %v994
      %1028 = vmatprep.subr.mxu0 0.0
      %1029 = vmatpush2.msra.mxu0 0.0
      %1030 = vmatprep.subr.mxu0 0.0
      %1031 = vmatpush2.msra.mxu0 0.0
      %1032 = vmatprep.subr.mxu0 0.0
      %1033 = vmatpush2.msra.mxu0 0.0
      %1034 = vmatprep.subr.mxu0 0.0
      %1035 = vmatpush2.msra.mxu0 0.0
      %1036 = vmatprep.subr.mxu0 0.0
      %1037 = vmatpush2.msra.mxu0 0.0
      %1038 = vmatprep.subr.mxu0 0.0
      %1039 = vmatpush2.msra.mxu0 0.0
      %1040 = vmatprep.subr.mxu0 0.0
      %1041 = vmatpush2.msra.mxu0 0.0
      %1042 = vmatprep.subr.mxu0 0.0
      %1043 = vmatpush2.msra.mxu0 0.0
      %1044 = vmatprep.subr.mxu0 0.0
      %1045 = vmatpush2.msra.mxu0 0.0
      %1046 = vmatprep.subr.mxu0 0.0
      %1047 = vmatpush2.msra.mxu0 0.0
      %1048 = vmatprep.subr.mxu0 0.0
      %1049 = vmatpush2.msra.mxu0 0.0
      %1050 = vmatprep.subr.mxu0 0.0
      %1051 = vmatpush2.msra.mxu0 0.0
      %1052 = vmatprep.subr.mxu0 0.0
      %1053 = vmatpush2.msra.mxu0 0.0
      %1054 = vmatprep.subr.mxu0 0.0
      %1055 = vmatpush2.msra.mxu0 0.0
      %1056 = vmatprep.subr.mxu0 0.0
      %1057 = vmatpush2.msra.mxu0 0.0
      %1058 = vmatprep.subr.mxu0 0.0
      %1059 = vmatpush2.msra.mxu0 0.0
      %1060 = vmatprep.mubr.f32.mxu0 0.0
      %1061 = vmatmul.mubr.f32.gmra.mxu0 %v990
      %v1062 = vpop.f32.mrf.mxu0
      %v1063 = vadd.f32 0.0, %v1062
      %v1064 = vpop.f32.mrf.mxu0
      %1065 = vdwg.mxu0
      %vm1066 = vcmask 523264
      %1067 = vst.msk [vmem:[%s258] sm:$0xff] %vm1066, %v1063
      %p1068 = scmp.lt.s32.totalorder %s20, 1
      %s1069 = scalar_select %p1068, %s20, 1
      %p1070 = scmp.lt.s32.totalorder %s21, 0
      %s1071 = scalar_select %p1070, %s21, 0
      %s1072 = sadd.s32 %s1071, %s1069
      %s1073 = smul.addr %s1072, 8
      %s1074 = scalar_lea.vmem %s5, %s1073
      // Predicated region
      $region41: #{transition_block_forward.1} parent=39 // pred_check
        %p1075 = pneg %p160
      $region42: #{transition_block_forward.1} parent=39 // pred_check_branch
        %1077 = sbr.rel (%p1075) target = $region44
      $region43: #{transition_block_forward.1} parent=39 // pred_region
        _
      $region44: #{transition_block_forward.1} parent=39 // pred_fallthru
        _
    $region40: #{transition_block_forward.1} parent=5 // pred_fallthru
      _
    %p1078 = scmp.le.s32.totalorder 2, %s11
    // Predicated region
    $region45: #{transition_block_forward.1} parent=5 // pred_check
      %p1079 = pneg %p1078
    $region46: #{transition_block_forward.1} parent=5 // pred_check_branch
      %1081 = sbr.rel (%p1079) target = $region48
    $region47: #{transition_block_forward.1} parent=5 // pred_region
      %s1082 = ssub.s32 %s11, 2
      // Predicated region
      $region49: #{transition_block_forward.1} parent=47 // pred_check
        %p1083 = pneg %p166
      $region50: #{transition_block_forward.1} parent=47 // pred_check_branch
        %1085 = sbr.rel (%p1083) target = $region52
      $region51: #{transition_block_forward.1} parent=47 // pred_region
        %p1086 = scmp.lt.s32.totalorder %s22, 1
        %s1087 = scalar_select %p1086, %s22, 1
        %p1088 = scmp.lt.s32.totalorder %s23, 0
        %s1089 = scalar_select %p1088, %s23, 0
        %s1090 = sadd.s32 %s1089, %s1087
        %s1091 = smul.addr %s1090, 8
        %s1092 = scalar_lea.vmem %s5, %s1091
      $region52: #{transition_block_forward.1} parent=47 // pred_fallthru
        _
    $region48: #{transition_block_forward.1} parent=5 // pred_fallthru
      _
  $region6: #{transition_block_forward.1} parent=0 // loop_footer
    %s15 = sadd.s32 1, %s11
  $region7: #{transition_block_forward.1} parent=0 // loop_footer_branch
    %10 = sbr.rel target = $region3
  $region8: #{transition_block_forward.1} parent=0 // loop_exit
    _

</llo_original>
